<compile_context>
chip_gen: v6e
topology: v6e:2x2x1
jax: 0.10.0
libtpu: 0.0.40
codegen_flags: <defaults>
</compile_context>

<pallas_src>
import functools

import jax
import jax.numpy as jnp
from jax.experimental import pallas as pl
from jax.experimental.pallas import tpu as pltpu


# ---------------------------------------------------------------------------
# Kernel (shared by the 3-D and 4-D layouts: reduction is always over axis=1)
# ---------------------------------------------------------------------------
def _pixel_normal_kernel(x_ref, o_ref, *, epsilon, normal):
    x = x_ref[...]
    xf = x.astype(jnp.float32)  # f32 accumulation for the channel mean
    if normal == 2:
        # inv = 1/sqrt(mean(x^2)+eps): rsqrt on the EUP + broadcast multiplies
        # (no full-block division).
        inv = jax.lax.rsqrt(jnp.mean(xf * xf, axis=1, keepdims=True) + epsilon)
    else:
        # Exact reciprocal of the small reduced array (channel axis collapsed);
        # the full block only sees multiplies.
        inv = 1.0 / (jnp.mean(jnp.abs(xf), axis=1, keepdims=True) + epsilon)
    # Multiply in f32, cast once -> matches reference precision for bf16 too.
    o_ref[...] = (xf * inv).astype(o_ref.dtype)


# ---------------------------------------------------------------------------
# Generation-aware VMEM budgets (block budget in f32 elements, vmem limit)
# ---------------------------------------------------------------------------
@functools.lru_cache(maxsize=None)
def _vmem_budgets():
    phys = 64 << 20  # conservative fallback (v7x has 64 MiB per TensorCore)
    try:
        info = pltpu.get_tpu_info()
        phys = int(getattr(info, "vmem_capacity_bytes", phys))
    except Exception:
        pass
    if phys <= (64 << 20):
        # v7x: smaller VMEM -> ~4 MiB blocks, 48 MiB scoped limit.
        return (4 << 20) // 4, 48 << 20
    # v5e / v6e: 128 MiB physical -> ~6 MiB blocks, 64 MiB scoped limit
    # (v5e's default scoped limit is only 16 MiB, so set it explicitly).
    return (6 << 20) // 4, 64 << 20


# ---------------------------------------------------------------------------
# Balanced tile selection (review item: bound padding, no 2x blowup)
# ---------------------------------------------------------------------------
def _pick_rows_tile(rows, c, sub, budget_elems):
    """Rows-per-block for the 4-D layout; multiple of `sub` or the full dim."""
    per_row = c * 128
    max_rows = max(sub, (budget_elems // max(1, per_row)) // sub * sub)
    if max_rows >= rows:
        return rows  # single full-dim block (always a legal block shape)
    n_tiles = pl.cdiv(rows, max_rows)
    return pl.cdiv(pl.cdiv(rows, n_tiles), sub) * sub


def _pick_lane_tile(hw, c, budget_elems):
    """Lanes-per-block for the 3-D fallback; multiple of 128 or the full dim."""
    max_ts = max(128, (budget_elems // max(1, c)) // 128 * 128)
    if max_ts >= hw:
        return hw
    n_tiles = pl.cdiv(hw, max_ts)
    return pl.cdiv(pl.cdiv(hw, n_tiles), 128) * 128


# ---------------------------------------------------------------------------
# Cached pallas_call builder
# ---------------------------------------------------------------------------
@functools.lru_cache(maxsize=None)
def _build_pixel_normal_call(shape, block, dtype_name, epsilon, normal, vmem_limit):
    dtype = jnp.dtype(dtype_name)
    if len(shape) == 4:
        index_map = lambda b, s: (b, 0, s, 0)
    else:
        index_map = lambda b, s: (b, 0, s)
    n_tiles = pl.cdiv(shape[2], block[2])  # ragged: Pallas masks the last block
    kernel = functools.partial(_pixel_normal_kernel, epsilon=epsilon, normal=normal)
    return pl.pallas_call(
        kernel,
        out_shape=jax.ShapeDtypeStruct(shape, dtype),
        grid_spec=pltpu.PrefetchScalarGridSpec(
            num_scalar_prefetch=0,
            grid=(shape[0], n_tiles),
            in_specs=[pl.BlockSpec(block, index_map)],
            out_specs=pl.BlockSpec(block, index_map),
        ),
        compiler_params=pltpu.CompilerParams(
            dimension_semantics=("parallel", "parallel"),
            vmem_limit_bytes=vmem_limit,
        ),
    )


# ---------------------------------------------------------------------------
# Wrapper
# ---------------------------------------------------------------------------
@functools.partial(jax.jit, static_argnames=("epsilon", "normal"))
def pixel_normal(x, *, epsilon=1e-8, normal=2):
    """x: (N, C, H, W).  Returns x / (channel-mean norm + eps), same dtype."""
    N, C, H, W = x.shape
    hw = H * W
    dtype = jnp.dtype(x.dtype)
    budget_elems, vmem_limit = _vmem_budgets()

    if hw % 128 == 0:
        # 4-D lane-dense layout: channel is a leading (non-vreg) axis, spatial
        # fills the (sublane, lane) tile completely.  Reshape is free.
        rows = hw // 128
        sub = 8 * max(1, 4 // dtype.itemsize)  # 8 (f32) / 16 (bf16)
        ts = _pick_rows_tile(rows, C, sub, budget_elems)
        xr = x.reshape(N, C, rows, 128)
        block = (1, C, ts, 128)
    else:
        # Ragged 3-D fallback (HW not a multiple of 128): no padding needed,
        # Pallas masks the partial last block; padded garbage stays confined
        # to masked-out columns (channel reduce is per-column).
        ts = _pick_lane_tile(hw, C, budget_elems)
        xr = x.reshape(N, C, hw)
        block = (1, C, ts)

    call = _build_pixel_normal_call(
        xr.shape, block, dtype.name, float(epsilon), int(normal), vmem_limit
    )
    return call(xr).reshape(N, C, H, W)


# ---------------------------------------------------------------------------
# Pure-JAX reference
# ---------------------------------------------------------------------------
def pixel_normal_ref(x, epsilon=1e-8, normal=2):
    x32 = x.astype(jnp.float32)
    if normal == 2:
        l = jnp.sqrt(jnp.mean(x32 * x32, axis=1, keepdims=True) + epsilon)
    else:
        l = jnp.mean(jnp.abs(x32), axis=1, keepdims=True) + epsilon
    return (x32 / l).astype(x.dtype)


if __name__ == "__main__":
    key = jax.random.PRNGKey(0)

    # Shapes implied by the module's forward: NCHW.
    N, C, H, W = 2, 4, 16, 16
    x = jax.random.normal(key, (N, C, H, W), dtype=jnp.float32)

    # L2 branch (4-D lane-dense path: 16*16 = 256 is a multiple of 128).
    out = jax.block_until_ready(pixel_normal(x, epsilon=1e-8, normal=2))
    ref = pixel_normal_ref(x, epsilon=1e-8, normal=2)
    assert out.shape == (N, C, H, W)
    assert jnp.allclose(out, ref, atol=1e-5, rtol=1e-5), "mismatch (L2) vs reference"

    # L1 branch.
    out_l1 = jax.block_until_ready(pixel_normal(x, epsilon=1e-8, normal=1))
    ref_l1 = pixel_normal_ref(x, epsilon=1e-8, normal=1)
    assert jnp.allclose(out_l1, ref_l1, atol=1e-5, rtol=1e-5), "mismatch (L1) vs reference"

    # Non-multiple-of-128 spatial size exercises the ragged 3-D fallback
    # (no padding, no post-slice).
    x_odd = jax.random.normal(jax.random.PRNGKey(1), (2, 4, 10, 10), dtype=jnp.float32)
    out_odd = jax.block_until_ready(pixel_normal(x_odd, epsilon=1e-8, normal=2))
    ref_odd = pixel_normal_ref(x_odd, epsilon=1e-8, normal=2)
    assert jnp.allclose(out_odd, ref_odd, atol=1e-5, rtol=1e-5), "mismatch (ragged) vs reference"

    # bf16 path (f32 accumulation + f32 multiply, single cast on store).
    x_bf16 = x.astype(jnp.bfloat16)
    out_bf = jax.block_until_ready(pixel_normal(x_bf16, epsilon=1e-8, normal=2))
    ref_bf = pixel_normal_ref(x_bf16, epsilon=1e-8, normal=2)
    assert jnp.allclose(
        out_bf.astype(jnp.float32), ref_bf.astype(jnp.float32), atol=2e-2, rtol=2e-2
    ), "mismatch (bf16) vs reference"

    print("KERNEL_OK")
</pallas_src>

<mosaic_0001>
module attributes {stable_mosaic.version = 11 : i64} {
  func.func @_pixel_normal_kernel(%arg0: i32, %arg1: i32, %arg2: memref<1x4x2x128xf32, #tpu.memory_space<vmem>>, %arg3: memref<1x4x2x128xf32, #tpu.memory_space<vmem>>) attributes {dimension_semantics = [#tpu.dimension_semantics<parallel>, #tpu.dimension_semantics<parallel>], iteration_bounds = array<i64: 2, 1>, scalar_prefetch = 0 : i64, scratch_operands = 0 : i64, tpu.core_type = #tpu.core_type<tc>, window_params = [{transform_indices = @transform_0, window_bounds = array<i64: 1, 4, 2, 128>}, {transform_indices = @transform_1, window_bounds = array<i64: 1, 4, 2, 128>}]} {
    %c0 = arith.constant 0 : index
    %c0_0 = arith.constant 0 : index
    %c0_1 = arith.constant 0 : index
    %c0_2 = arith.constant 0 : index
    %0 = vector.load %arg2[%c0, %c0_0, %c0_1, %c0_2] : memref<1x4x2x128xf32, #tpu.memory_space<vmem>>, vector<1x4x2x128xf32>
    %1 = arith.mulf %0, %0 : vector<1x4x2x128xf32>
    %cst = arith.constant dense<0.000000e+00> : vector<1x2x128xf32>
    %2 = vector.multi_reduction <add>, %1, %cst [1] : vector<1x4x2x128xf32> to vector<1x2x128xf32>
    %3 = vector.shape_cast %2 : vector<1x2x128xf32> to vector<1x1x2x128xf32>
    %cst_3 = arith.constant 4.000000e+00 : f32
    %4 = vector.broadcast %cst_3 : f32 to vector<1x1x2x128xf32>
    %5 = arith.divf %3, %4 : vector<1x1x2x128xf32>
    %cst_4 = arith.constant 9.99999993E-9 : f32
    %6 = vector.broadcast %cst_4 : f32 to vector<1x1x2x128xf32>
    %7 = arith.addf %5, %6 : vector<1x1x2x128xf32>
    %8 = math.rsqrt %7 : vector<1x1x2x128xf32>
    %9 = vector.broadcast %8 : vector<1x1x2x128xf32> to vector<1x4x2x128xf32>
    %10 = arith.mulf %0, %9 : vector<1x4x2x128xf32>
    %c0_5 = arith.constant 0 : index
    %c0_6 = arith.constant 0 : index
    %c0_7 = arith.constant 0 : index
    %c0_8 = arith.constant 0 : index
    %11 = vector.load %arg3[%c0_5, %c0_6, %c0_7, %c0_8] : memref<1x4x2x128xf32, #tpu.memory_space<vmem>>, vector<1x4x2x128xf32>
    tpu.vector_store %arg3[%c0_5, %c0_6, %c0_7, %c0_8], %10 {strides = array<i32>} : memref<1x4x2x128xf32, #tpu.memory_space<vmem>>, vector<1x4x2x128xf32>,
    return
  }
  func.func @transform_0(%arg0: i32, %arg1: i32) -> (i32, i32, i32, i32) {
    %c0_i32 = arith.constant 0 : i32
    %c0_i32_0 = arith.constant 0 : i32
    %c0_i32_1 = arith.constant 0 : i32
    return %arg0, %c0_i32, %arg1, %c0_i32_0 : i32, i32, i32, i32
  }
  func.func @transform_1(%arg0: i32, %arg1: i32) -> (i32, i32, i32, i32) {
    %c0_i32 = arith.constant 0 : i32
    %c0_i32_0 = arith.constant 0 : i32
    %c0_i32_1 = arith.constant 0 : i32
    return %arg0, %c0_i32, %arg1, %c0_i32_0 : i32, i32, i32, i32
  }
}

</mosaic_0001>

<llo_original>
// kernel: pixel_normal.1
$region0: #{pixel_normal.1}
  #allocation0 [shape = 'u32[]', space=smem, size = 0x4, offset = 0x4, fixed_abs, tag = 'smem constant byte address 0x4 - core index']
  #allocation1 [shape = 'u32[144,128]{1,0:T(1,128)}', space=vmem, size = 0x12000, scoped, tag = 'internal scratch']
  %s0 = inlined_call_operand.vmem [shape: f32[2,4,2,128], index: 0, kind: input, shape index: {}]
  %s1 = inlined_call_operand.vmem [shape: f32[2,4,2,128], index: 1, kind: output, shape index: {}]
  %s2 = sld [smem:[#allocation0]]
  $region37: #{pixel_normal.1} parent=0
    _
  %s4 = ssub.s32 1, %s2
  %s5 = scalar_select 0, %s4, %s2
  loop: start=0, step=1, limit=4
  $region2: #{pixel_normal.1} parent=0 // loop_pre_header
    _
  $region3: #{pixel_normal.1} parent=0 // loop_header
    %s7 = sphi 0, %s11
    %p8 = scmp.ge.s32.totalorder %s7, 4
    %s14 = sphi 0, %s26
    %s15 = sphi 0, %s22
    %s16 = sphi 0, %s14
    %s17 = sphi 0, %s15
    %s18 = sphi 0, %s16
    %s19 = sphi 0, %s17
    %s31 = sphi 0, %s33
    %s34 = sphi 0, %s31
    %s35 = sphi 0, %s34
    %s51 = sphi 0, %s35
    %s59 = sphi 0, %s61
    %s62 = sphi 0, %s59
    %s63 = sphi 0, %s62
    %s79 = sphi 0, %s63
  $region4: #{pixel_normal.1} parent=0 // loop_header_branch
    %10 = sbr.rel (%p8) target = $region8
  $region5: #{pixel_normal.1} parent=0 // loop_body
    %s12 = ssub.s32 %s7, 1
    %s13 = ssub.s32 %s7, 2
    %s20 = sadd.s32 1, %s15
    %p21 = scmp.ge.s32.totalorder %s20, 1
    %s22 = scalar_select %p21, 0, %s20
    %s23 = sadd.s32 1, %s14
    %s24 = scalar_select %p21, %s23, %s14
    %p25 = scmp.ge.s32.totalorder %s24, 2
    %s26 = scalar_select %p25, 0, %s24
    %s27 = ssub.s32 %s14, %s26
    %s28 = ssub.s32 %s15, %s22
    %s29 = sor.u32 %s27, %s28
    %p30 = scmp.eq.s32.totalorder %s29, 0
    %s32 = sadd.s32 %s31, 1
    %s33 = scalar_select %p30, %s31, %s32
    %p36 = pneg %p30
    %p37 = scmp.eq.s32.totalorder %s7, 1
    %p38 = por %p36, %p37
    %p39 = scmp.ne.s32.totalorder %s31, %s34
    %p40 = scmp.eq.s32.totalorder %s7, 0
    %p41 = por %p39, %p40
    %p42 = scmp.ne.s32.totalorder %s31, %s34
    %p43 = scmp.eq.s32.totalorder %s12, 1
    %p44 = por %p42, %p43
    %p45 = scmp.ne.s32.totalorder %s34, %s35
    %p46 = scmp.eq.s32.totalorder %s12, 0
    %p47 = por %p45, %p46
    %p48 = scmp.ne.s32.totalorder %s34, %s35
    %p49 = scmp.eq.s32.totalorder %s13, 1
    %p50 = por %p48, %p49
    %p52 = scmp.ne.s32.totalorder %s35, %s51
    %p53 = scmp.eq.s32.totalorder %s13, 0
    %p54 = por %p52, %p53
    %s55 = ssub.s32 %s14, %s26
    %s56 = ssub.s32 %s15, %s22
    %s57 = sor.u32 %s55, %s56
    %p58 = scmp.eq.s32.totalorder %s57, 0
    %s60 = sadd.s32 %s59, 1
    %s61 = scalar_select %p58, %s59, %s60
    %p64 = pneg %p58
    %p65 = scmp.eq.s32.totalorder %s7, 1
    %p66 = por %p64, %p65
    %p67 = scmp.ne.s32.totalorder %s59, %s62
    %p68 = scmp.eq.s32.totalorder %s7, 0
    %p69 = por %p67, %p68
    %p70 = scmp.ne.s32.totalorder %s59, %s62
    %p71 = scmp.eq.s32.totalorder %s12, 1
    %p72 = por %p70, %p71
    %p73 = scmp.ne.s32.totalorder %s62, %s63
    %p74 = scmp.eq.s32.totalorder %s12, 0
    %p75 = por %p73, %p74
    %p76 = scmp.ne.s32.totalorder %s62, %s63
    %p77 = scmp.eq.s32.totalorder %s13, 1
    %p78 = por %p76, %p77
    %p80 = scmp.ne.s32.totalorder %s63, %s79
    %p81 = scmp.eq.s32.totalorder %s13, 0
    %p82 = por %p80, %p81
    %p83 = scmp.le.s32.totalorder 1, %s7
    %p84 = scmp.lt.s32.totalorder %s7, 3
    %p85 = pnand %p83, %p84
    %p86 = pneg %p85
    // Predicated region
    $region9: #{pixel_normal.1} parent=5 // pred_check
      _
    $region10: #{pixel_normal.1} parent=5 // pred_check_branch
      %88 = sbr.rel (%p85) target = $region12
    $region11: #{pixel_normal.1} parent=5 // pred_region
      %s89 = ssub.s32 %s7, 1
    $region12: #{pixel_normal.1} parent=5 // pred_fallthru
      _
    %p90 = scmp.lt.s32.totalorder %s7, 2
    // Predicated region
    $region13: #{pixel_normal.1} parent=5 // pred_check
      %p91 = pneg %p90
    $region14: #{pixel_normal.1} parent=5 // pred_check_branch
      %93 = sbr.rel (%p91) target = $region16
    $region15: #{pixel_normal.1} parent=5 // pred_region
      // Predicated region
      $region17: #{pixel_normal.1} parent=15 // pred_check
        %p94 = pneg %p41
      $region18: #{pixel_normal.1} parent=15 // pred_check_branch
        %96 = sbr.rel (%p94) target = $region20
      $region19: #{pixel_normal.1} parent=15 // pred_region
        %p97 = scmp.lt.s32.totalorder %s14, 1
        %s98 = scalar_select %p97, %s14, 1
        %p99 = scmp.lt.s32.totalorder %s15, 0
        %s100 = scalar_select %p99, %s15, 0
        %s101 = smul.addr %s98, 4
        %s102 = sadd.s32 %s100, %s101
        %s103 = smul.addr %s102, 2
        %s104 = scalar_lea.vmem %s0, %s103
      $region20: #{pixel_normal.1} parent=15 // pred_fallthru
        _
    $region16: #{pixel_normal.1} parent=5 // pred_fallthru
      _
    %p105 = scmp.le.s32.totalorder 1, %s7
    %p106 = scmp.lt.s32.totalorder %s7, 3
    %p107 = pnand %p105, %p106
    %p108 = pneg %p107
    // Predicated region
    $region21: #{pixel_normal.1} parent=5 // pred_check
      _
    $region22: #{pixel_normal.1} parent=5 // pred_check_branch
      %110 = sbr.rel (%p107) target = $region24
    $region23: #{pixel_normal.1} parent=5 // pred_region
      %s111 = ssub.s32 %s7, 1
      %p112 = scmp.lt.s32.totalorder %s16, 1
      %s113 = scalar_select %p112, %s16, 1
      %p114 = scmp.lt.s32.totalorder %s17, 0
      %s115 = scalar_select %p114, %s17, 0
      %s116 = smul.addr %s113, 4
      %s117 = sadd.s32 %s115, %s116
      %s118 = smul.addr %s117, 2
      %s119 = scalar_lea.vmem %s0, %s118
      %p120 = pneg %p47
      %p121 = pneg %p44
      %p122 = pneg %p75
      %p123 = pneg %p72
      %p124 = scmp.lt.s32.totalorder %s16, 1
      %s125 = scalar_select %p124, %s16, 1
      %p126 = scmp.lt.s32.totalorder %s17, 0
      %s127 = scalar_select %p126, %s17, 0
      %s128 = smul.addr %s125, 4
      %s129 = sadd.s32 %s127, %s128
      %s130 = smul.addr %s129, 2
      %s131 = scalar_lea.vmem %s1, %s130
      %p132 = scmp.lt.s32.totalorder %s16, 1
      %s133 = scalar_select %p132, %s16, 1
      %p134 = scmp.lt.s32.totalorder %s17, 0
      %s135 = scalar_select %p134, %s17, 0
      %s136 = smul.addr %s133, 4
      %s137 = sadd.s32 %s135, %s136
      %s138 = smul.addr %s137, 2
      %s139 = scalar_lea.vmem %s0, %s138
      %p140 = scmp.lt.s32.totalorder %s16, 1
      %s141 = scalar_select %p140, %s16, 1
      %p142 = scmp.lt.s32.totalorder %s17, 0
      %s143 = scalar_select %p142, %s17, 0
      %s144 = smul.addr %s141, 4
      %s145 = sadd.s32 %s143, %s144
      %s146 = smul.addr %s145, 2
      %s147 = scalar_lea.vmem %s1, %s146
      %v148 = vld [vmem:[%s139] sm:$0x3]
      %v149 = vld [vmem:[%s139 + $0x2] sm:$0x3]
      %v150 = vld [vmem:[%s139 + $0x4] sm:$0x3]
      %v151 = vld [vmem:[%s139 + $0x6] sm:$0x3]
      %v152 = vmul.f32 %v148, %v148
      %v153 = vmul.f32 %v149, %v149
      %v154 = vmul.f32 %v150, %v150
      %v155 = vmul.f32 %v151, %v151
      %vm156 = vcmask 1041408
      %v157 = vsel %vm156, %v152, 0.0
      %v158 = vsel %vm156, %v153, 0.0
      %v159 = vadd.f32 %v157, %v158
      %v160 = vsel %vm156, %v154, 0.0
      %v161 = vadd.f32 %v159, %v160
      %v162 = vsel %vm156, %v155, 0.0
      %v163 = vadd.f32 %v161, %v162
      %v164 = vrcp.pop 4.0
      %v165 = vmul.f32 %v163, %v164
      %v166 = vadd.f32 %v165, 1e-08
      %v167 = vrsqrt.pop %v166
      %v168 = vmul.f32 %v148, %v167
      %v169 = vmul.f32 %v149, %v167
      %v170 = vmul.f32 %v150, %v167
      %v171 = vmul.f32 %v151, %v167
      %172 = vst [vmem:[%s147] sm:$0x3] %v168
      %173 = vst [vmem:[%s147 + $0x2] sm:$0x3] %v169
      %174 = vst [vmem:[%s147 + $0x4] sm:$0x3] %v170
      %175 = vst [vmem:[%s147 + $0x6] sm:$0x3] %v171
      %p176 = scmp.lt.s32.totalorder %s16, 1
      %s177 = scalar_select %p176, %s16, 1
      %p178 = scmp.lt.s32.totalorder %s17, 0
      %s179 = scalar_select %p178, %s17, 0
      %s180 = smul.addr %s177, 4
      %s181 = sadd.s32 %s179, %s180
      %s182 = smul.addr %s181, 2
      %s183 = scalar_lea.vmem %s1, %s182
      // Predicated region
      $region25: #{pixel_normal.1} parent=23 // pred_check
        %p184 = pneg %p72
      $region26: #{pixel_normal.1} parent=23 // pred_check_branch
        %186 = sbr.rel (%p184) target = $region28
      $region27: #{pixel_normal.1} parent=23 // pred_region
        _
      $region28: #{pixel_normal.1} parent=23 // pred_fallthru
        _
    $region24: #{pixel_normal.1} parent=5 // pred_fallthru
      _
    %p187 = scmp.le.s32.totalorder 2, %s7
    // Predicated region
    $region29: #{pixel_normal.1} parent=5 // pred_check
      %p188 = pneg %p187
    $region30: #{pixel_normal.1} parent=5 // pred_check_branch
      %190 = sbr.rel (%p188) target = $region32
    $region31: #{pixel_normal.1} parent=5 // pred_region
      %s191 = ssub.s32 %s7, 2
      // Predicated region
      $region33: #{pixel_normal.1} parent=31 // pred_check
        %p192 = pneg %p78
      $region34: #{pixel_normal.1} parent=31 // pred_check_branch
        %194 = sbr.rel (%p192) target = $region36
      $region35: #{pixel_normal.1} parent=31 // pred_region
        %p195 = scmp.lt.s32.totalorder %s18, 1
        %s196 = scalar_select %p195, %s18, 1
        %p197 = scmp.lt.s32.totalorder %s19, 0
        %s198 = scalar_select %p197, %s19, 0
        %s199 = smul.addr %s196, 4
        %s200 = sadd.s32 %s198, %s199
        %s201 = smul.addr %s200, 2
        %s202 = scalar_lea.vmem %s1, %s201
      $region36: #{pixel_normal.1} parent=31 // pred_fallthru
        _
    $region32: #{pixel_normal.1} parent=5 // pred_fallthru
      _
  $region6: #{pixel_normal.1} parent=0 // loop_footer
    %s11 = sadd.s32 1, %s7
  $region7: #{pixel_normal.1} parent=0 // loop_footer_branch
    %6 = sbr.rel target = $region3
  $region8: #{pixel_normal.1} parent=0 // loop_exit
    _

</llo_original>
